<compile_context>
chip_gen: v6e
topology: v6e:2x2x1
jax: 0.10.0
libtpu: 0.0.40
codegen_flags: <defaults>
</compile_context>

<pallas_src>
import jax
import jax.numpy as jnp
import numpy as np
from jax.experimental import pallas as pl
from jax.experimental.pallas import tpu as pltpu


# Tap enumeration order — shared by the kernel (patches row order) and the wrapper
# (weight-matrix column order), so the coupling is enforced by construction.
_TAPS = tuple((dh, dw) for dh in (-1, 0, 1) for dw in (-1, 0, 1))


def _make_residual_kernel(W, lanes):
    """lanes = images_per_step * H * W (lane width of one grid step)."""

    def kernel(x_ref, mask_ref, w1_ref, b1_ref, w2_ref, b2_ref, out_ref):
        # x_ref   : (C, L)   lane-folded activations
        # mask_ref: (9, L)   precomputed 0/1 'SAME'-padding validity per tap
        # w*_ref  : (C, 9*C) rows = c_out, cols tap-major / c_in-minor (matches _TAPS)
        # b*_ref  : (C, 1)
        # out_ref : (C, L)
        x = x_ref[...]
        # Load each tap's mask row once; reused by both convs.
        tap_masks = [mask_ref[t:t + 1, :] for t in range(len(_TAPS))]

        def conv3x3_same(act, w_ref, b_ref):
            taps = []
            for t, (dh, dw) in enumerate(_TAPS):
                off = dh * W + dw
                if off == 0:
                    taps.append(act)  # center tap is always in-image (mask == 1)
                    continue
                # roll so that tap[p] = act[p + off]; wrapped lanes are out-of-image
                # (or belong to a neighbouring image) and get zeroed by the mask.
                shifted = pltpu.roll(act, shift=(-off) % lanes, axis=1)
                taps.append(shifted * tap_masks[t])
            # Transposed im2col built in registers: (9*C, L).
            patches = jnp.concatenate(taps, axis=0)
            # Single lane-dense MXU matmul per conv: (C, 9C) x (9C, L) -> (C, L).
            y = jnp.dot(w_ref[...], patches, preferred_element_type=jnp.float32)
            return y + b_ref[...]  # bias broadcast along lanes

        y1 = jnp.maximum(conv3x3_same(x, w1_ref, b1_ref), 0.0)
        y2 = conv3x3_same(y1, w2_ref, b2_ref)
        # Residual add: spatial dims preserved -> the module's `try` branch.
        out_ref[...] = x + y2

    return kernel


def _tap_masks(H, W, lanes):
    """(9, lanes) float32 0/1 masks; lane index = image-local (h*W + w) via pos % HW."""
    HW = H * W
    pos = np.arange(lanes)
    pi = pos % HW
    h = pi // W
    w = pi % W
    m = np.stack([
        ((h + dh >= 0) & (h + dh < H) & (w + dw >= 0) & (w + dw < W)).astype(np.float32)
        for dh, dw in _TAPS
    ])
    return jnp.asarray(m)


def _weight_matrix(w_hwio):
    """HWIO (3,3,Cin,Cout) -> (Cout, 9*Cin), column order tied to _TAPS by construction."""
    return jnp.concatenate(
        [w_hwio[dh + 1, dw + 1, :, :].T for (dh, dw) in _TAPS], axis=1)


def _default_num_blocks(N):
    # v7x has 2 TensorCores/chip: split the lane-folded batch 2-way ("parallel") so
    # both TCs get work.  v5e/v6e have 1 TC -> full folding (a single step) is best.
    try:
        kind = jax.devices()[0].device_kind.lower()
    except Exception:
        kind = ""
    if "v7" in kind and N % 2 == 0 and N >= 2:
        return 2
    return 1


def _vmem_limit_bytes(C, Lb):
    f32 = 4
    act_blocks = 2 * 2 * C * Lb                               # x-in + out, double-buffered
    const_blocks = 2 * (2 * 9 * C * C + 2 * C + 9 * Lb)       # w1, w2, b1, b2, masks
    patches = 2 * 9 * C * Lb                                  # im2col temporaries (2 convs)
    est = f32 * (act_blocks + const_blocks + patches)
    # Generous headroom for Mosaic-internal scratch; still far below the scoped default.
    return max(2 * 1024 * 1024, 8 * est)


def residual_forward(x_nchw, w1_hwio, b1, w2_hwio, b2, num_blocks=None):
    """Forward of Residual(Conv3x3 -> ReLU -> Conv3x3).

    x_nchw: (N, C, H, W) float32 (PyTorch NCHW). Conv weights in HWIO (3, 3, C, C),
    biases (C,). Returns (N, C, H, W).
    """
    N, C, H, W = x_nchw.shape
    HW = H * W
    if num_blocks is None:
        num_blocks = _default_num_blocks(N)
    assert N % num_blocks == 0, "num_blocks must divide the batch"
    Lb = (N // num_blocks) * HW          # lanes handled per grid step (whole images)
    L = N * HW

    # Lane-folded layout (C, N*HW): channels on sublanes, batch folded into lanes.
    x_cl = jnp.transpose(x_nchw, (1, 0, 2, 3)).reshape(C, L)

    wm1 = _weight_matrix(w1_hwio)        # (C, 9C)
    wm2 = _weight_matrix(w2_hwio)
    b1c = b1.reshape(C, 1)
    b2c = b2.reshape(C, 1)
    masks = _tap_masks(H, W, Lb)         # (9, Lb), identical for every block

    kernel = _make_residual_kernel(W, Lb)

    out_cl = pl.pallas_call(
        kernel,
        out_shape=jax.ShapeDtypeStruct((C, L), jnp.float32),
        grid_spec=pltpu.PrefetchScalarGridSpec(
            num_scalar_prefetch=0,
            grid=(num_blocks,),
            in_specs=[
                pl.BlockSpec((C, Lb), lambda i: (0, i)),        # activations
                pl.BlockSpec((9, Lb), lambda i: (0, 0)),        # constant tap masks
                pl.BlockSpec((C, 9 * C), lambda i: (0, 0)),     # w1
                pl.BlockSpec((C, 1), lambda i: (0, 0)),         # b1
                pl.BlockSpec((C, 9 * C), lambda i: (0, 0)),     # w2
                pl.BlockSpec((C, 1), lambda i: (0, 0)),         # b2
            ],
            out_specs=pl.BlockSpec((C, Lb), lambda i: (0, i)),
        ),
        compiler_params=pltpu.CompilerParams(
            dimension_semantics=("parallel",),                  # megacore on v7x
            vmem_limit_bytes=_vmem_limit_bytes(C, Lb),
        ),
    )(x_cl, masks, wm1, b1c, wm2, b2c)

    return jnp.transpose(out_cl.reshape(C, N, H, W), (1, 0, 2, 3))


def residual_reference(x_nchw, w1_hwio, b1, w2_hwio, b2):
    """Pure-JAX reference (same math as the PyTorch module)."""
    x = jnp.transpose(x_nchw, (0, 2, 3, 1))
    dn = ("NHWC", "HWIO", "NHWC")
    y = jax.lax.conv_general_dilated(x, w1_hwio, (1, 1), "SAME",
                                     dimension_numbers=dn) + b1
    y = jnp.maximum(y, 0.0)
    y = jax.lax.conv_general_dilated(y, w2_hwio, (1, 1), "SAME",
                                     dimension_numbers=dn) + b2
    return jnp.transpose(x + y, (0, 3, 1, 2))


if __name__ == "__main__":
    N, C, H, W = 2, 4, 16, 16

    key = jax.random.PRNGKey(0)
    kx, kw1, kb1, kw2, kb2 = jax.random.split(key, 5)

    x = jax.random.normal(kx, (N, C, H, W), dtype=jnp.float32)
    # Deterministic synthetic "Conv2d" parameters (HWIO layout), Kaiming-ish scale.
    scale = 1.0 / jnp.sqrt(9.0 * C)
    w1 = jax.random.normal(kw1, (3, 3, C, C), dtype=jnp.float32) * scale
    b1 = jax.random.normal(kb1, (C,), dtype=jnp.float32) * 0.1
    w2 = jax.random.normal(kw2, (3, 3, C, C), dtype=jnp.float32) * scale
    b2 = jax.random.normal(kb2, (C,), dtype=jnp.float32) * 0.1

    out = residual_forward(x, w1, b1, w2, b2)
    out = jax.block_until_ready(out)

    ref = residual_reference(x, w1, b1, w2, b2)
    assert out.shape == (N, C, H, W)
    assert jnp.allclose(out, ref, atol=1e-4, rtol=1e-4), "mismatch vs JAX reference"

    print("KERNEL_OK")
</pallas_src>

<mosaic_0001>
module attributes {stable_mosaic.version = 11 : i64} {
  func.func @kernel(%arg0: i32, %arg1: memref<4x512xf32, #tpu.memory_space<vmem>>, %arg2: memref<9x512xf32, #tpu.memory_space<vmem>>, %arg3: memref<4x36xf32, #tpu.memory_space<vmem>>, %arg4: memref<4x1xf32, #tpu.memory_space<vmem>>, %arg5: memref<4x36xf32, #tpu.memory_space<vmem>>, %arg6: memref<4x1xf32, #tpu.memory_space<vmem>>, %arg7: memref<4x512xf32, #tpu.memory_space<vmem>>) attributes {dimension_semantics = [#tpu.dimension_semantics<parallel>], iteration_bounds = array<i64: 1>, scalar_prefetch = 0 : i64, scratch_operands = 0 : i64, tpu.core_type = #tpu.core_type<tc>, window_params = [{transform_indices = @transform_0, window_bounds = array<i64: 4, 512>}, {pipeline_mode = #tpu.pipeline_mode<synchronous>, transform_indices = @transform_1, window_bounds = array<i64: 9, 512>}, {pipeline_mode = #tpu.pipeline_mode<synchronous>, transform_indices = @transform_2, window_bounds = array<i64: 4, 36>}, {pipeline_mode = #tpu.pipeline_mode<synchronous>, transform_indices = @transform_3, window_bounds = array<i64: 4, 1>}, {pipeline_mode = #tpu.pipeline_mode<synchronous>, transform_indices = @transform_4, window_bounds = array<i64: 4, 36>}, {pipeline_mode = #tpu.pipeline_mode<synchronous>, transform_indices = @transform_5, window_bounds = array<i64: 4, 1>}, {transform_indices = @transform_6, window_bounds = array<i64: 4, 512>}]} {
    %c0 = arith.constant 0 : index
    %c0_0 = arith.constant 0 : index
    %0 = vector.load %arg1[%c0, %c0_0] : memref<4x512xf32, #tpu.memory_space<vmem>>, vector<4x512xf32>
    %c0_1 = arith.constant 0 : index
    %c0_2 = arith.constant 0 : index
    %1 = vector.load %arg2[%c0_1, %c0_2] : memref<9x512xf32, #tpu.memory_space<vmem>>, vector<1x512xf32>
    %c1 = arith.constant 1 : index
    %c0_3 = arith.constant 0 : index
    %2 = vector.load %arg2[%c1, %c0_3] : memref<9x512xf32, #tpu.memory_space<vmem>>, vector<1x512xf32>
    %c2 = arith.constant 2 : index
    %c0_4 = arith.constant 0 : index
    %3 = vector.load %arg2[%c2, %c0_4] : memref<9x512xf32, #tpu.memory_space<vmem>>, vector<1x512xf32>
    %c3 = arith.constant 3 : index
    %c0_5 = arith.constant 0 : index
    %4 = vector.load %arg2[%c3, %c0_5] : memref<9x512xf32, #tpu.memory_space<vmem>>, vector<1x512xf32>
    %c5 = arith.constant 5 : index
    %c0_6 = arith.constant 0 : index
    %5 = vector.load %arg2[%c5, %c0_6] : memref<9x512xf32, #tpu.memory_space<vmem>>, vector<1x512xf32>
    %c6 = arith.constant 6 : index
    %c0_7 = arith.constant 0 : index
    %6 = vector.load %arg2[%c6, %c0_7] : memref<9x512xf32, #tpu.memory_space<vmem>>, vector<1x512xf32>
    %c7 = arith.constant 7 : index
    %c0_8 = arith.constant 0 : index
    %7 = vector.load %arg2[%c7, %c0_8] : memref<9x512xf32, #tpu.memory_space<vmem>>, vector<1x512xf32>
    %c8 = arith.constant 8 : index
    %c0_9 = arith.constant 0 : index
    %8 = vector.load %arg2[%c8, %c0_9] : memref<9x512xf32, #tpu.memory_space<vmem>>, vector<1x512xf32>
    %c17_i32 = arith.constant 17 : i32
    %9 = tpu.dynamic_rotate %0 by %c17_i32 dim 1 : vector<4x512xf32>, i32 -> vector<4x512xf32>
    %10 = vector.broadcast %1 : vector<1x512xf32> to vector<4x512xf32>
    %11 = arith.mulf %9, %10 : vector<4x512xf32>
    %c16_i32 = arith.constant 16 : i32
    %12 = tpu.dynamic_rotate %0 by %c16_i32 dim 1 : vector<4x512xf32>, i32 -> vector<4x512xf32>
    %13 = vector.broadcast %2 : vector<1x512xf32> to vector<4x512xf32>
    %14 = arith.mulf %12, %13 : vector<4x512xf32>
    %c15_i32 = arith.constant 15 : i32
    %15 = tpu.dynamic_rotate %0 by %c15_i32 dim 1 : vector<4x512xf32>, i32 -> vector<4x512xf32>
    %16 = vector.broadcast %3 : vector<1x512xf32> to vector<4x512xf32>
    %17 = arith.mulf %15, %16 : vector<4x512xf32>
    %c1_i32 = arith.constant 1 : i32
    %18 = tpu.dynamic_rotate %0 by %c1_i32 dim 1 : vector<4x512xf32>, i32 -> vector<4x512xf32>
    %19 = vector.broadcast %4 : vector<1x512xf32> to vector<4x512xf32>
    %20 = arith.mulf %18, %19 : vector<4x512xf32>
    %c511_i32 = arith.constant 511 : i32
    %21 = tpu.dynamic_rotate %0 by %c511_i32 dim 1 : vector<4x512xf32>, i32 -> vector<4x512xf32>
    %22 = vector.broadcast %5 : vector<1x512xf32> to vector<4x512xf32>
    %23 = arith.mulf %21, %22 : vector<4x512xf32>
    %c497_i32 = arith.constant 497 : i32
    %24 = tpu.dynamic_rotate %0 by %c497_i32 dim 1 : vector<4x512xf32>, i32 -> vector<4x512xf32>
    %25 = vector.broadcast %6 : vector<1x512xf32> to vector<4x512xf32>
    %26 = arith.mulf %24, %25 : vector<4x512xf32>
    %c496_i32 = arith.constant 496 : i32
    %27 = tpu.dynamic_rotate %0 by %c496_i32 dim 1 : vector<4x512xf32>, i32 -> vector<4x512xf32>
    %28 = vector.broadcast %7 : vector<1x512xf32> to vector<4x512xf32>
    %29 = arith.mulf %27, %28 : vector<4x512xf32>
    %c495_i32 = arith.constant 495 : i32
    %30 = tpu.dynamic_rotate %0 by %c495_i32 dim 1 : vector<4x512xf32>, i32 -> vector<4x512xf32>
    %31 = vector.broadcast %8 : vector<1x512xf32> to vector<4x512xf32>
    %32 = arith.mulf %30, %31 : vector<4x512xf32>
    %33 = tpu.concatenate %11, %14, %17, %20, %0, %23, %26, %29, %32 in 0 : vector<4x512xf32>, vector<4x512xf32>, vector<4x512xf32>, vector<4x512xf32>, vector<4x512xf32>, vector<4x512xf32>, vector<4x512xf32>, vector<4x512xf32>, vector<4x512xf32> -> vector<36x512xf32>
    %c0_10 = arith.constant 0 : index
    %c0_11 = arith.constant 0 : index
    %34 = vector.load %arg3[%c0_10, %c0_11] : memref<4x36xf32, #tpu.memory_space<vmem>>, vector<4x36xf32>
    %cst = arith.constant dense<0.000000e+00> : vector<4x512xf32>
    %35 = tpu.matmul %34, %33, %cst {dimension_numbers = #tpu.dot_dimension_numbers<[1], [0], [0], [1], [0, 0, 1, 1], [], []>} : vector<4x36xf32>, vector<36x512xf32>, vector<4x512xf32> -> vector<4x512xf32>
    %c0_12 = arith.constant 0 : index
    %c0_13 = arith.constant 0 : index
    %36 = vector.load %arg4[%c0_12, %c0_13] : memref<4x1xf32, #tpu.memory_space<vmem>>, vector<4x1xf32>
    %37 = vector.broadcast %36 : vector<4x1xf32> to vector<4x512xf32>
    %38 = arith.addf %35, %37 : vector<4x512xf32>
    %cst_14 = arith.constant 0.000000e+00 : f32
    %39 = vector.broadcast %cst_14 : f32 to vector<4x512xf32>
    %40 = arith.maximumf %38, %39 : vector<4x512xf32>
    %c17_i32_15 = arith.constant 17 : i32
    %41 = tpu.dynamic_rotate %40 by %c17_i32_15 dim 1 : vector<4x512xf32>, i32 -> vector<4x512xf32>
    %42 = vector.broadcast %1 : vector<1x512xf32> to vector<4x512xf32>
    %43 = arith.mulf %41, %42 : vector<4x512xf32>
    %c16_i32_16 = arith.constant 16 : i32
    %44 = tpu.dynamic_rotate %40 by %c16_i32_16 dim 1 : vector<4x512xf32>, i32 -> vector<4x512xf32>
    %45 = vector.broadcast %2 : vector<1x512xf32> to vector<4x512xf32>
    %46 = arith.mulf %44, %45 : vector<4x512xf32>
    %c15_i32_17 = arith.constant 15 : i32
    %47 = tpu.dynamic_rotate %40 by %c15_i32_17 dim 1 : vector<4x512xf32>, i32 -> vector<4x512xf32>
    %48 = vector.broadcast %3 : vector<1x512xf32> to vector<4x512xf32>
    %49 = arith.mulf %47, %48 : vector<4x512xf32>
    %c1_i32_18 = arith.constant 1 : i32
    %50 = tpu.dynamic_rotate %40 by %c1_i32_18 dim 1 : vector<4x512xf32>, i32 -> vector<4x512xf32>
    %51 = vector.broadcast %4 : vector<1x512xf32> to vector<4x512xf32>
    %52 = arith.mulf %50, %51 : vector<4x512xf32>
    %c511_i32_19 = arith.constant 511 : i32
    %53 = tpu.dynamic_rotate %40 by %c511_i32_19 dim 1 : vector<4x512xf32>, i32 -> vector<4x512xf32>
    %54 = vector.broadcast %5 : vector<1x512xf32> to vector<4x512xf32>
    %55 = arith.mulf %53, %54 : vector<4x512xf32>
    %c497_i32_20 = arith.constant 497 : i32
    %56 = tpu.dynamic_rotate %40 by %c497_i32_20 dim 1 : vector<4x512xf32>, i32 -> vector<4x512xf32>
    %57 = vector.broadcast %6 : vector<1x512xf32> to vector<4x512xf32>
    %58 = arith.mulf %56, %57 : vector<4x512xf32>
    %c496_i32_21 = arith.constant 496 : i32
    %59 = tpu.dynamic_rotate %40 by %c496_i32_21 dim 1 : vector<4x512xf32>, i32 -> vector<4x512xf32>
    %60 = vector.broadcast %7 : vector<1x512xf32> to vector<4x512xf32>
    %61 = arith.mulf %59, %60 : vector<4x512xf32>
    %c495_i32_22 = arith.constant 495 : i32
    %62 = tpu.dynamic_rotate %40 by %c495_i32_22 dim 1 : vector<4x512xf32>, i32 -> vector<4x512xf32>
    %63 = vector.broadcast %8 : vector<1x512xf32> to vector<4x512xf32>
    %64 = arith.mulf %62, %63 : vector<4x512xf32>
    %65 = tpu.concatenate %43, %46, %49, %52, %40, %55, %58, %61, %64 in 0 : vector<4x512xf32>, vector<4x512xf32>, vector<4x512xf32>, vector<4x512xf32>, vector<4x512xf32>, vector<4x512xf32>, vector<4x512xf32>, vector<4x512xf32>, vector<4x512xf32> -> vector<36x512xf32>
    %c0_23 = arith.constant 0 : index
    %c0_24 = arith.constant 0 : index
    %66 = vector.load %arg5[%c0_23, %c0_24] : memref<4x36xf32, #tpu.memory_space<vmem>>, vector<4x36xf32>
    %cst_25 = arith.constant dense<0.000000e+00> : vector<4x512xf32>
    %67 = tpu.matmul %66, %65, %cst_25 {dimension_numbers = #tpu.dot_dimension_numbers<[1], [0], [0], [1], [0, 0, 1, 1], [], []>} : vector<4x36xf32>, vector<36x512xf32>, vector<4x512xf32> -> vector<4x512xf32>
    %c0_26 = arith.constant 0 : index
    %c0_27 = arith.constant 0 : index
    %68 = vector.load %arg6[%c0_26, %c0_27] : memref<4x1xf32, #tpu.memory_space<vmem>>, vector<4x1xf32>
    %69 = vector.broadcast %68 : vector<4x1xf32> to vector<4x512xf32>
    %70 = arith.addf %67, %69 : vector<4x512xf32>
    %71 = arith.addf %0, %70 : vector<4x512xf32>
    %c0_28 = arith.constant 0 : index
    %c0_29 = arith.constant 0 : index
    %72 = vector.load %arg7[%c0_28, %c0_29] : memref<4x512xf32, #tpu.memory_space<vmem>>, vector<4x512xf32>
    tpu.vector_store %arg7[%c0_28, %c0_29], %71 {strides = array<i32>} : memref<4x512xf32, #tpu.memory_space<vmem>>, vector<4x512xf32>,
    return
  }
  func.func @transform_0(%arg0: i32) -> (i32, i32) {
    %c0_i32 = arith.constant 0 : i32
    %c0_i32_0 = arith.constant 0 : i32
    return %c0_i32, %arg0 : i32, i32
  }
  func.func @transform_1(%arg0: i32) -> (i32, i32) {
    %c0_i32 = arith.constant 0 : i32
    %c0_i32_0 = arith.constant 0 : i32
    %c0_i32_1 = arith.constant 0 : i32
    return %c0_i32, %c0_i32_0 : i32, i32
  }
  func.func @transform_2(%arg0: i32) -> (i32, i32) {
    %c0_i32 = arith.constant 0 : i32
    %c0_i32_0 = arith.constant 0 : i32
    %c0_i32_1 = arith.constant 0 : i32
    return %c0_i32, %c0_i32_0 : i32, i32
  }
  func.func @transform_3(%arg0: i32) -> (i32, i32) {
    %c0_i32 = arith.constant 0 : i32
    %c0_i32_0 = arith.constant 0 : i32
    %c0_i32_1 = arith.constant 0 : i32
    return %c0_i32, %c0_i32_0 : i32, i32
  }
  func.func @transform_4(%arg0: i32) -> (i32, i32) {
    %c0_i32 = arith.constant 0 : i32
    %c0_i32_0 = arith.constant 0 : i32
    %c0_i32_1 = arith.constant 0 : i32
    return %c0_i32, %c0_i32_0 : i32, i32
  }
  func.func @transform_5(%arg0: i32) -> (i32, i32) {
    %c0_i32 = arith.constant 0 : i32
    %c0_i32_0 = arith.constant 0 : i32
    %c0_i32_1 = arith.constant 0 : i32
    return %c0_i32, %c0_i32_0 : i32, i32
  }
  func.func @transform_6(%arg0: i32) -> (i32, i32) {
    %c0_i32 = arith.constant 0 : i32
    %c0_i32_0 = arith.constant 0 : i32
    return %c0_i32, %arg0 : i32, i32
  }
}

</mosaic_0001>

<llo_original>
// kernel: tpu_custom_call.1
$region0: #{tpu_custom_call.1}
  #allocation0 [shape = 'u32[]', space=smem, size = 0x4, offset = 0x4, fixed_abs, tag = 'smem constant byte address 0x4 - core index']
  #allocation1 [shape = 'u32[144,128]{1,0:T(1,128)}', space=vmem, size = 0x12000, scoped, tag = 'internal scratch']
  %s0 = inlined_call_operand.hbm [shape: f32[4,512], index: 0, kind: input, shape index: {}]
  %s1 = inlined_call_operand.hbm [shape: f32[9,512], index: 1, kind: input, shape index: {}]
  %s2 = inlined_call_operand.vmem [shape: f32[4,36], index: 2, kind: input, shape index: {}]
  %s3 = inlined_call_operand.vmem [shape: f32[4,1], index: 3, kind: input, shape index: {}]
  %s4 = inlined_call_operand.vmem [shape: f32[4,36], index: 4, kind: input, shape index: {}]
  %s5 = inlined_call_operand.vmem [shape: f32[4,1], index: 5, kind: input, shape index: {}]
  %s6 = inlined_call_operand.hbm [shape: f32[4,512], index: 6, kind: output, shape index: {}]
  %s7 = sld [smem:[#allocation0]]
  $region42: #{tpu_custom_call.1} parent=0
    _
  %s9 = ssub.s32 1, %s7
  %s10 = scalar_select 0, %s9, %s7
  $region1: #{tpu_custom_call.1} parent=0
    #allocation2 [shape = 'u8[8192]{0}', space=vmem, size = 0x2000, scoped, tag = 'input window, operand 0, single buffered']
    #allocation3 [shape = 's32[1]{0}', space=sflag, size = 0x4, scoped, tag = 'scoped memory for tpu_custom_call.1']
    #allocation4 [shape = 's32[1]{0}', space=sflag, size = 0x4, scoped, tag = 'scoped memory for tpu_custom_call.1']
    #allocation5 [shape = 'u8[32768]{0}', space=vmem, size = 0x8000, scoped, tag = 'input window, operand 1, single buffered']
    #allocation6 [shape = 's32[1]{0}', space=sflag, size = 0x4, scoped, tag = 'scoped memory for tpu_custom_call.1']
    #allocation7 [shape = 'u8[8192]{0}', space=vmem, size = 0x2000, scoped, tag = 'output window, operand 0, single buffered']
    %11 = vsyncpa [#allocation3], 0
    %12 = vsyncpa [#allocation6], 0
    %13 = vsyncpa [#allocation4], 0
    // Predicated region
    $region2: #{tpu_custom_call.1} parent=1 // pred_check
      _
    $region3: #{tpu_custom_call.1} parent=1 // pred_check_branch
      %15 = sbr.rel (0) target = $region5
    $region4: #{tpu_custom_call.1} parent=1 // pred_region
      %s17 = ssub.s32 256, 256
      %18 = vsyncadd [#allocation3], %s17
      %s20 = sshll.u32 [#allocation2], 4
      %s21 = int_to_ptr.vmem [resolvable:$true] %s20
      %23 = dma.hbm_to_vmem [thread:$0]  %s0, 256, %s21, [#allocation3]
    $region5: #{tpu_custom_call.1} parent=1 // pred_fallthru
      _
    // Predicated region
    $region6: #{tpu_custom_call.1} parent=1 // pred_check
      _
    $region7: #{tpu_custom_call.1} parent=1 // pred_check_branch
      %25 = sbr.rel (0) target = $region9
    $region8: #{tpu_custom_call.1} parent=1 // pred_region
      %s27 = ssub.s32 1024, 1024
      %28 = vsyncadd [#allocation6], %s27
      %s29 = sshll.u32 [#allocation5], 4
      %s30 = int_to_ptr.vmem [resolvable:$true] %s29
      %35 = dma.hbm_to_vmem [thread:$0]  %s1, 1024, %s30, [#allocation6], 512, 512, 32
    $region9: #{tpu_custom_call.1} parent=1 // pred_fallthru
      _
    // Predicated region
    $region10: #{tpu_custom_call.1} parent=1 // pred_check
      _
    $region11: #{tpu_custom_call.1} parent=1 // pred_check_branch
      %37 = sbr.rel (0) target = $region13
    $region12: #{tpu_custom_call.1} parent=1 // pred_region
      _
    $region13: #{tpu_custom_call.1} parent=1 // pred_fallthru
      _
    // Predicated region
    $region14: #{tpu_custom_call.1} parent=1 // pred_check
      _
    $region15: #{tpu_custom_call.1} parent=1 // pred_check_branch
      %39 = sbr.rel (0) target = $region17
    $region16: #{tpu_custom_call.1} parent=1 // pred_region
      _
    $region17: #{tpu_custom_call.1} parent=1 // pred_fallthru
      _
    // Predicated region
    $region18: #{tpu_custom_call.1} parent=1 // pred_check
      _
    $region19: #{tpu_custom_call.1} parent=1 // pred_check_branch
      %41 = sbr.rel (0) target = $region21
    $region20: #{tpu_custom_call.1} parent=1 // pred_region
      _
    $region21: #{tpu_custom_call.1} parent=1 // pred_fallthru
      _
    // Predicated region
    $region22: #{tpu_custom_call.1} parent=1 // pred_check
      _
    $region23: #{tpu_custom_call.1} parent=1 // pred_check_branch
      %43 = sbr.rel (0) target = $region25
    $region24: #{tpu_custom_call.1} parent=1 // pred_region
      _
    $region25: #{tpu_custom_call.1} parent=1 // pred_fallthru
      _
    // Predicated region
    $region26: #{tpu_custom_call.1} parent=1 // pred_check
      _
    $region27: #{tpu_custom_call.1} parent=1 // pred_check_branch
      %45 = sbr.rel (0) target = $region29
    $region28: #{tpu_custom_call.1} parent=1 // pred_region
      %46 = dma.done [#allocation3], 256
    $region29: #{tpu_custom_call.1} parent=1 // pred_fallthru
      _
    // Predicated region
    $region30: #{tpu_custom_call.1} parent=1 // pred_check
      _
    $region31: #{tpu_custom_call.1} parent=1 // pred_check_branch
      %48 = sbr.rel (0) target = $region33
    $region32: #{tpu_custom_call.1} parent=1 // pred_region
      %49 = dma.done [#allocation6], 1024
    $region33: #{tpu_custom_call.1} parent=1 // pred_fallthru
      _
    %v50 = vld [vmem:[#allocation2] sm:$0xff]
    %v51 = vld [vmem:[#allocation2 + $0x8] sm:$0xff]
    %v52 = vld [vmem:[#allocation5] ss:$8 sm:$0xf]
    %s53 = scalar_lea.vmem [#allocation5], 1
    %v54 = vld [vmem:[%s53] ss:$8 sm:$0xf]
    %s55 = scalar_lea.vmem [#allocation5], 2
    %v56 = vld [vmem:[%s55] ss:$8 sm:$0xf]
    %s57 = scalar_lea.vmem [#allocation5], 3
    %v58 = vld [vmem:[%s57] ss:$8 sm:$0xf]
    %s59 = scalar_lea.vmem [#allocation5], 5
    %v60 = vld [vmem:[%s59] ss:$8 sm:$0xf]
    %s61 = scalar_lea.vmem [#allocation5], 6
    %v62 = vld [vmem:[%s61] ss:$8 sm:$0xf]
    %s63 = scalar_lea.vmem [#allocation5], 7
    %v64 = vld [vmem:[%s63] ss:$8 sm:$0xf]
    %s65 = scalar_lea.vmem [#allocation5], 32
    %v66 = vld [vmem:[%s65] ss:$8 sm:$0xf]
    %v69 = vcombine.high %v50, %v50
    %v70 = vcombine.high %v51, %v51
    %73 = vrot.lane.b32.xlu0 %v50, 17
    %v74 = vpop.permute.xlu0 %73
    %75 = vrot.lane.b32.xlu0 %v69, 17
    %v76 = vpop.permute.xlu0 %75
    %77 = vrot.lane.b32.xlu0 %v51, 17
    %v78 = vpop.permute.xlu0 %77
    %79 = vrot.lane.b32.xlu0 %v70, 17
    %v80 = vpop.permute.xlu0 %79
    %v81 = vlaneseq
    %v82 = vand.u32 %v81, 127
    %vm83 = vcmp.lt.s32.totalorder %v82, 17
    %v84 = vsel %vm83, %v78, %v80
    %v85 = vsel %vm83, %v76, %v78
    %v86 = vsel %vm83, %v74, %v76
    %v87 = vsel %vm83, %v80, %v74
    %v89 = vlaneseq
    %v90 = vshrl.u32 %v89, 7
    %v91 = vsub.s32 0, %v90
    %v92 = vrot.slane %v52, %v91
    %v93 = vlaneseq
    %v94 = vshrl.u32 %v93, 7
    %v95 = vsub.s32 1, %v94
    %v96 = vrot.slane %v52, %v95
    %v97 = vlaneseq
    %v98 = vshrl.u32 %v97, 7
    %v99 = vsub.s32 2, %v98
    %v100 = vrot.slane %v52, %v99
    %v101 = vlaneseq
    %v102 = vshrl.u32 %v101, 7
    %v103 = vsub.s32 3, %v102
    %v104 = vrot.slane %v52, %v103
    %v109 = vmul.f32 %v87, %v92
    %v110 = vmul.f32 %v86, %v96
    %v111 = vmul.f32 %v85, %v100
    %v112 = vmul.f32 %v84, %v104
    %113 = vrot.lane.b32.xlu0 %v50, 16
    %v114 = vpop.permute.xlu0 %113
    %115 = vrot.lane.b32.xlu0 %v69, 16
    %v116 = vpop.permute.xlu0 %115
    %117 = vrot.lane.b32.xlu0 %v51, 16
    %v118 = vpop.permute.xlu0 %117
    %119 = vrot.lane.b32.xlu0 %v70, 16
    %v120 = vpop.permute.xlu0 %119
    %vm121 = vcmp.lt.s32.totalorder %v82, 16
    %v122 = vsel %vm121, %v118, %v120
    %v123 = vsel %vm121, %v116, %v118
    %v124 = vsel %vm121, %v114, %v116
    %v125 = vsel %vm121, %v120, %v114
    %v127 = vlaneseq
    %v128 = vshrl.u32 %v127, 7
    %v129 = vsub.s32 0, %v128
    %v130 = vrot.slane %v54, %v129
    %v131 = vlaneseq
    %v132 = vshrl.u32 %v131, 7
    %v133 = vsub.s32 1, %v132
    %v134 = vrot.slane %v54, %v133
    %v135 = vlaneseq
    %v136 = vshrl.u32 %v135, 7
    %v137 = vsub.s32 2, %v136
    %v138 = vrot.slane %v54, %v137
    %v139 = vlaneseq
    %v140 = vshrl.u32 %v139, 7
    %v141 = vsub.s32 3, %v140
    %v142 = vrot.slane %v54, %v141
    %v147 = vmul.f32 %v125, %v130
    %v148 = vmul.f32 %v124, %v134
    %v149 = vmul.f32 %v123, %v138
    %v150 = vmul.f32 %v122, %v142
    %151 = vrot.lane.b32.xlu0 %v50, 15
    %v152 = vpop.permute.xlu0 %151
    %153 = vrot.lane.b32.xlu0 %v69, 15
    %v154 = vpop.permute.xlu0 %153
    %155 = vrot.lane.b32.xlu0 %v51, 15
    %v156 = vpop.permute.xlu0 %155
    %157 = vrot.lane.b32.xlu0 %v70, 15
    %v158 = vpop.permute.xlu0 %157
    %vm159 = vcmp.lt.s32.totalorder %v82, 15
    %v160 = vsel %vm159, %v156, %v158
    %v161 = vsel %vm159, %v154, %v156
    %v162 = vsel %vm159, %v152, %v154
    %v163 = vsel %vm159, %v158, %v152
    %v165 = vlaneseq
    %v166 = vshrl.u32 %v165, 7
    %v167 = vsub.s32 0, %v166
    %v168 = vrot.slane %v56, %v167
    %v169 = vlaneseq
    %v170 = vshrl.u32 %v169, 7
    %v171 = vsub.s32 1, %v170
    %v172 = vrot.slane %v56, %v171
    %v173 = vlaneseq
    %v174 = vshrl.u32 %v173, 7
    %v175 = vsub.s32 2, %v174
    %v176 = vrot.slane %v56, %v175
    %v177 = vlaneseq
    %v178 = vshrl.u32 %v177, 7
    %v179 = vsub.s32 3, %v178
    %v180 = vrot.slane %v56, %v179
    %v185 = vmul.f32 %v163, %v168
    %v186 = vmul.f32 %v162, %v172
    %v187 = vmul.f32 %v161, %v176
    %v188 = vmul.f32 %v160, %v180
    %189 = vrot.lane.b32.xlu0 %v50, 1
    %v190 = vpop.permute.xlu0 %189
    %191 = vrot.lane.b32.xlu0 %v69, 1
    %v192 = vpop.permute.xlu0 %191
    %193 = vrot.lane.b32.xlu0 %v51, 1
    %v194 = vpop.permute.xlu0 %193
    %195 = vrot.lane.b32.xlu0 %v70, 1
    %v196 = vpop.permute.xlu0 %195
    %vm197 = vcmp.lt.s32.totalorder %v82, 1
    %v198 = vsel %vm197, %v194, %v196
    %v199 = vsel %vm197, %v192, %v194
    %v200 = vsel %vm197, %v190, %v192
    %v201 = vsel %vm197, %v196, %v190
    %v203 = vlaneseq
    %v204 = vshrl.u32 %v203, 7
    %v205 = vsub.s32 0, %v204
    %v206 = vrot.slane %v58, %v205
    %v207 = vlaneseq
    %v208 = vshrl.u32 %v207, 7
    %v209 = vsub.s32 1, %v208
    %v210 = vrot.slane %v58, %v209
    %v211 = vlaneseq
    %v212 = vshrl.u32 %v211, 7
    %v213 = vsub.s32 2, %v212
    %v214 = vrot.slane %v58, %v213
    %v215 = vlaneseq
    %v216 = vshrl.u32 %v215, 7
    %v217 = vsub.s32 3, %v216
    %v218 = vrot.slane %v58, %v217
    %v223 = vmul.f32 %v201, %v206
    %v224 = vmul.f32 %v200, %v210
    %v225 = vmul.f32 %v199, %v214
    %v226 = vmul.f32 %v198, %v218
    %227 = vrot.lane.b32.xlu0 %v50, 127
    %v228 = vpop.permute.xlu0 %227
    %229 = vrot.lane.b32.xlu0 %v69, 127
    %v230 = vpop.permute.xlu0 %229
    %231 = vrot.lane.b32.xlu0 %v51, 127
    %v232 = vpop.permute.xlu0 %231
    %233 = vrot.lane.b32.xlu0 %v70, 127
    %v234 = vpop.permute.xlu0 %233
    %vm235 = vcmp.lt.s32.totalorder %v82, 127
    %v236 = vsel %vm235, %v232, %v234
    %v237 = vsel %vm235, %v230, %v232
    %v238 = vsel %vm235, %v228, %v230
    %v239 = vsel %vm235, %v234, %v228
    %v241 = vlaneseq
    %v242 = vshrl.u32 %v241, 7
    %v243 = vsub.s32 0, %v242
    %v244 = vrot.slane %v60, %v243
    %v245 = vlaneseq
    %v246 = vshrl.u32 %v245, 7
    %v247 = vsub.s32 1, %v246
    %v248 = vrot.slane %v60, %v247
    %v249 = vlaneseq
    %v250 = vshrl.u32 %v249, 7
    %v251 = vsub.s32 2, %v250
    %v252 = vrot.slane %v60, %v251
    %v253 = vlaneseq
    %v254 = vshrl.u32 %v253, 7
    %v255 = vsub.s32 3, %v254
    %v256 = vrot.slane %v60, %v255
    %v261 = vmul.f32 %v238, %v244
    %v262 = vmul.f32 %v237, %v248
    %v263 = vmul.f32 %v236, %v252
    %v264 = vmul.f32 %v239, %v256
    %265 = vrot.lane.b32.xlu0 %v50, 113
    %v266 = vpop.permute.xlu0 %265
    %267 = vrot.lane.b32.xlu0 %v69, 113
    %v268 = vpop.permute.xlu0 %267
    %269 = vrot.lane.b32.xlu0 %v51, 113
    %v270 = vpop.permute.xlu0 %269
    %271 = vrot.lane.b32.xlu0 %v70, 113
    %v272 = vpop.permute.xlu0 %271
    %vm273 = vcmp.lt.s32.totalorder %v82, 113
    %v274 = vsel %vm273, %v270, %v272
    %v275 = vsel %vm273, %v268, %v270
    %v276 = vsel %vm273, %v266, %v268
    %v277 = vsel %vm273, %v272, %v266
    %v279 = vlaneseq
    %v280 = vshrl.u32 %v279, 7
    %v281 = vsub.s32 0, %v280
    %v282 = vrot.slane %v62, %v281
    %v283 = vlaneseq
    %v284 = vshrl.u32 %v283, 7
    %v285 = vsub.s32 1, %v284
    %v286 = vrot.slane %v62, %v285
    %v287 = vlaneseq
    %v288 = vshrl.u32 %v287, 7
    %v289 = vsub.s32 2, %v288
    %v290 = vrot.slane %v62, %v289
    %v291 = vlaneseq
    %v292 = vshrl.u32 %v291, 7
    %v293 = vsub.s32 3, %v292
    %v294 = vrot.slane %v62, %v293
    %v299 = vmul.f32 %v276, %v282
    %v300 = vmul.f32 %v275, %v286
    %v301 = vmul.f32 %v274, %v290
    %v302 = vmul.f32 %v277, %v294
    %303 = vrot.lane.b32.xlu0 %v50, 112
    %v304 = vpop.permute.xlu0 %303
    %305 = vrot.lane.b32.xlu0 %v69, 112
    %v306 = vpop.permute.xlu0 %305
    %307 = vrot.lane.b32.xlu0 %v51, 112
    %v308 = vpop.permute.xlu0 %307
    %309 = vrot.lane.b32.xlu0 %v70, 112
    %v310 = vpop.permute.xlu0 %309
    %vm311 = vcmp.lt.s32.totalorder %v82, 112
    %v312 = vsel %vm311, %v308, %v310
    %v313 = vsel %vm311, %v306, %v308
    %v314 = vsel %vm311, %v304, %v306
    %v315 = vsel %vm311, %v310, %v304
    %v317 = vlaneseq
    %v318 = vshrl.u32 %v317, 7
    %v319 = vsub.s32 0, %v318
    %v320 = vrot.slane %v64, %v319
    %v321 = vlaneseq
    %v322 = vshrl.u32 %v321, 7
    %v323 = vsub.s32 1, %v322
    %v324 = vrot.slane %v64, %v323
    %v325 = vlaneseq
    %v326 = vshrl.u32 %v325, 7
    %v327 = vsub.s32 2, %v326
    %v328 = vrot.slane %v64, %v327
    %v329 = vlaneseq
    %v330 = vshrl.u32 %v329, 7
    %v331 = vsub.s32 3, %v330
    %v332 = vrot.slane %v64, %v331
    %v337 = vmul.f32 %v314, %v320
    %v338 = vmul.f32 %v313, %v324
    %v339 = vmul.f32 %v312, %v328
    %v340 = vmul.f32 %v315, %v332
    %341 = vrot.lane.b32.xlu0 %v50, 111
    %v342 = vpop.permute.xlu0 %341
    %343 = vrot.lane.b32.xlu0 %v69, 111
    %v344 = vpop.permute.xlu0 %343
    %345 = vrot.lane.b32.xlu0 %v51, 111
    %v346 = vpop.permute.xlu0 %345
    %347 = vrot.lane.b32.xlu0 %v70, 111
    %v348 = vpop.permute.xlu0 %347
    %vm349 = vcmp.lt.s32.totalorder %v82, 111
    %v350 = vsel %vm349, %v346, %v348
    %v351 = vsel %vm349, %v344, %v346
    %v352 = vsel %vm349, %v342, %v344
    %v353 = vsel %vm349, %v348, %v342
    %v355 = vlaneseq
    %v356 = vshrl.u32 %v355, 7
    %v357 = vsub.s32 0, %v356
    %v358 = vrot.slane %v66, %v357
    %v359 = vlaneseq
    %v360 = vshrl.u32 %v359, 7
    %v361 = vsub.s32 1, %v360
    %v362 = vrot.slane %v66, %v361
    %v363 = vlaneseq
    %v364 = vshrl.u32 %v363, 7
    %v365 = vsub.s32 2, %v364
    %v366 = vrot.slane %v66, %v365
    %v367 = vlaneseq
    %v368 = vshrl.u32 %v367, 7
    %v369 = vsub.s32 3, %v368
    %v370 = vrot.slane %v66, %v369
    %v375 = vmul.f32 %v352, %v358
    %v376 = vmul.f32 %v351, %v362
    %v377 = vmul.f32 %v350, %v366
    %v378 = vmul.f32 %v353, %v370
    %v383 = vrot.slane %v147, 4
    %v384 = vrot.slane %v148, 4
    %v385 = vrot.slane %v149, 4
    %v386 = vrot.slane %v150, 4
    %v395 = vrot.slane %v223, 4
    %v396 = vrot.slane %v224, 4
    %v397 = vrot.slane %v225, 4
    %v398 = vrot.slane %v226, 4
    %v407 = vrot.slane %v261, 4
    %v408 = vrot.slane %v262, 4
    %v409 = vrot.slane %v263, 4
    %v410 = vrot.slane %v264, 4
    %v419 = vrot.slane %v337, 4
    %v420 = vrot.slane %v338, 4
    %v421 = vrot.slane %v339, 4
    %v422 = vrot.slane %v340, 4
    %vm427 = vcmask 1043456
    %v428 = vsel %vm427, %v109, %v383
    %v429 = vsel %vm427, %v110, %v384
    %v430 = vsel %vm427, %v111, %v385
    %v431 = vsel %vm427, %v112, %v386
    %v432 = vsel %vm427, %v185, %v395
    %v433 = vsel %vm427, %v186, %v396
    %v434 = vsel %vm427, %v187, %v397
    %v435 = vsel %vm427, %v188, %v398
    %v436 = vsel %vm427, %v50, %v407
    %v437 = vsel %vm427, %v69, %v408
    %v438 = vsel %vm427, %v51, %v409
    %v439 = vsel %vm427, %v70, %v410
    %v440 = vsel %vm427, %v299, %v419
    %v441 = vsel %vm427, %v300, %v420
    %v442 = vsel %vm427, %v301, %v421
    %v443 = vsel %vm427, %v302, %v422
    %v444 = vld [vmem:[%s2] sm:$0xf]
    %v445 = vld [vmem:[%s3] sm:$0xf]
    %447 = vset.pattern.permute.xlu0 0
    %448 = vperm.xlu0 %447, %v445
    %v449 = vpop.permute.xlu0 %448
    %vm451 = vcmask 293888
    %v453 = vsel %vm451, %v444, 0
    %v456 = vsel %vm427, %v375, 0
    %v459 = vsel %vm427, %v376, 0
    %v462 = vsel %vm427, %v377, 0
    %v465 = vsel %vm427, %v378, 0
    %467 = vmatprep.subr.mxu0 0.0
    %468 = vmatpush1.msra.mxu0 0.0
    %469 = vmatprep.subr.mxu0 0.0
    %470 = vmatpush1.msra.mxu0 0.0
    %471 = vmatprep.subr.mxu0 0.0
    %472 = vmatpush1.msra.mxu0 0.0
    %473 = vmatprep.subr.mxu0 0.0
    %474 = vmatpush1.msra.mxu0 0.0
    %475 = vmatprep.subr.mxu0 0.0
    %476 = vmatpush1.msra.mxu0 0.0
    %477 = vmatprep.subr.mxu0 0.0
    %478 = vmatpush1.msra.mxu0 0.0
    %479 = vmatprep.subr.mxu0 0.0
    %480 = vmatpush1.msra.mxu0 0.0
    %481 = vmatprep.subr.mxu0 0.0
    %482 = vmatpush1.msra.mxu0 0.0
    %483 = vmatprep.subr.mxu0 0.0
    %484 = vmatpush1.msra.mxu0 0.0
    %485 = vmatprep.subr.mxu0 0.0
    %486 = vmatpush1.msra.mxu0 0.0
    %487 = vmatprep.subr.mxu0 0.0
    %488 = vmatpush1.msra.mxu0 0.0
    %489 = vmatprep.subr.mxu0 %v459
    %490 = vmatpush1.msra.mxu0 %v456
    %491 = vmatprep.subr.mxu0 %v441
    %492 = vmatpush1.msra.mxu0 %v440
    %493 = vmatprep.subr.mxu0 %v437
    %494 = vmatpush1.msra.mxu0 %v436
    %495 = vmatprep.subr.mxu0 %v433
    %496 = vmatpush1.msra.mxu0 %v432
    %497 = vmatprep.subr.mxu0 %v429
    %498 = vmatpush1.msra.mxu0 %v428
    %499 = vmatprep.subr.mxu0 0.0
    %500 = vmatpush2.msra.mxu0 0.0
    %501 = vmatprep.subr.mxu0 0.0
    %502 = vmatpush2.msra.mxu0 0.0
    %503 = vmatprep.subr.mxu0 0.0
    %504 = vmatpush2.msra.mxu0 0.0
    %505 = vmatprep.subr.mxu0 0.0
    %506 = vmatpush2.msra.mxu0 0.0
    %507 = vmatprep.subr.mxu0 0.0
    %508 = vmatpush2.msra.mxu0 0.0
    %509 = vmatprep.subr.mxu0 0.0
    %510 = vmatpush2.msra.mxu0 0.0
    %511 = vmatprep.subr.mxu0 0.0
    %512 = vmatpush2.msra.mxu0 0.0
    %513 = vmatprep.subr.mxu0 0.0
    %514 = vmatpush2.msra.mxu0 0.0
    %515 = vmatprep.subr.mxu0 0.0
    %516 = vmatpush2.msra.mxu0 0.0
    %517 = vmatprep.subr.mxu0 0.0
    %518 = vmatpush2.msra.mxu0 0.0
    %519 = vmatprep.subr.mxu0 0.0
    %520 = vmatpush2.msra.mxu0 0.0
    %521 = vmatprep.subr.mxu0 0.0
    %522 = vmatpush2.msra.mxu0 0.0
    %523 = vmatprep.subr.mxu0 0.0
    %524 = vmatpush2.msra.mxu0 0.0
    %525 = vmatprep.subr.mxu0 0.0
    %526 = vmatpush2.msra.mxu0 0.0
    %527 = vmatprep.subr.mxu0 0.0
    %528 = vmatpush2.msra.mxu0 0.0
    %529 = vmatprep.subr.mxu0 0.0
    %530 = vmatpush2.msra.mxu0 0.0
    %531 = vmatprep.mubr.f32.mxu0 0.0
    %532 = vmatmul.mubr.f32.gmra.mxu0 %v453
    %v533 = vpop.f32.mrf.mxu0
    %v534 = vadd.f32 %v449, %v533
    %v535 = vpop.f32.mrf.mxu0
    %v536 = vadd.f32 %v449, %v535
    %537 = vdwg.mxu0
    %538 = vmatprep.subr.mxu0 0.0
    %539 = vmatpush1.msra.mxu0 0.0
    %540 = vmatprep.subr.mxu0 0.0
    %541 = vmatpush1.msra.mxu0 0.0
    %542 = vmatprep.subr.mxu0 0.0
    %543 = vmatpush1.msra.mxu0 0.0
    %544 = vmatprep.subr.mxu0 0.0
    %545 = vmatpush1.msra.mxu0 0.0
    %546 = vmatprep.subr.mxu0 0.0
    %547 = vmatpush1.msra.mxu0 0.0
    %548 = vmatprep.subr.mxu0 0.0
    %549 = vmatpush1.msra.mxu0 0.0
    %550 = vmatprep.subr.mxu0 0.0
    %551 = vmatpush1.msra.mxu0 0.0
    %552 = vmatprep.subr.mxu0 0.0
    %553 = vmatpush1.msra.mxu0 0.0
    %554 = vmatprep.subr.mxu0 0.0
    %555 = vmatpush1.msra.mxu0 0.0
    %556 = vmatprep.subr.mxu0 0.0
    %557 = vmatpush1.msra.mxu0 0.0
    %558 = vmatprep.subr.mxu0 0.0
    %559 = vmatpush1.msra.mxu0 0.0
    %560 = vmatprep.subr.mxu0 %v465
    %561 = vmatpush1.msra.mxu0 %v462
    %562 = vmatprep.subr.mxu0 %v443
    %563 = vmatpush1.msra.mxu0 %v442
    %564 = vmatprep.subr.mxu0 %v439
    %565 = vmatpush1.msra.mxu0 %v438
    %566 = vmatprep.subr.mxu0 %v435
    %567 = vmatpush1.msra.mxu0 %v434
    %568 = vmatprep.subr.mxu0 %v431
    %569 = vmatpush1.msra.mxu0 %v430
    %570 = vmatprep.subr.mxu0 0.0
    %571 = vmatpush2.msra.mxu0 0.0
    %572 = vmatprep.subr.mxu0 0.0
    %573 = vmatpush2.msra.mxu0 0.0
    %574 = vmatprep.subr.mxu0 0.0
    %575 = vmatpush2.msra.mxu0 0.0
    %576 = vmatprep.subr.mxu0 0.0
    %577 = vmatpush2.msra.mxu0 0.0
    %578 = vmatprep.subr.mxu0 0.0
    %579 = vmatpush2.msra.mxu0 0.0
    %580 = vmatprep.subr.mxu0 0.0
    %581 = vmatpush2.msra.mxu0 0.0
    %582 = vmatprep.subr.mxu0 0.0
    %583 = vmatpush2.msra.mxu0 0.0
    %584 = vmatprep.subr.mxu0 0.0
    %585 = vmatpush2.msra.mxu0 0.0
    %586 = vmatprep.subr.mxu0 0.0
    %587 = vmatpush2.msra.mxu0 0.0
    %588 = vmatprep.subr.mxu0 0.0
    %589 = vmatpush2.msra.mxu0 0.0
    %590 = vmatprep.subr.mxu0 0.0
    %591 = vmatpush2.msra.mxu0 0.0
    %592 = vmatprep.subr.mxu0 0.0
    %593 = vmatpush2.msra.mxu0 0.0
    %594 = vmatprep.subr.mxu0 0.0
    %595 = vmatpush2.msra.mxu0 0.0
    %596 = vmatprep.subr.mxu0 0.0
    %597 = vmatpush2.msra.mxu0 0.0
    %598 = vmatprep.subr.mxu0 0.0
    %599 = vmatpush2.msra.mxu0 0.0
    %600 = vmatprep.subr.mxu0 0.0
    %601 = vmatpush2.msra.mxu0 0.0
    %602 = vmatprep.mubr.f32.mxu0 0.0
    %603 = vmatmul.mubr.f32.gmra.mxu0 %v453
    %v604 = vpop.f32.mrf.mxu0
    %v605 = vadd.f32 %v449, %v604
    %v606 = vpop.f32.mrf.mxu0
    %v607 = vadd.f32 %v449, %v606
    %608 = vdwg.mxu0
    %v609 = vmax.f32 %v534, 0.0
    %v610 = vmax.f32 %v536, 0.0
    %v611 = vmax.f32 %v605, 0.0
    %v612 = vmax.f32 %v607, 0.0
    %613 = vrot.lane.b32.xlu0 %v609, 17
    %v614 = vpop.permute.xlu0 %613
    %615 = vrot.lane.b32.xlu0 %v610, 17
    %v616 = vpop.permute.xlu0 %615
    %617 = vrot.lane.b32.xlu0 %v611, 17
    %v618 = vpop.permute.xlu0 %617
    %619 = vrot.lane.b32.xlu0 %v612, 17
    %v620 = vpop.permute.xlu0 %619
    %v621 = vsel %vm83, %v618, %v620
    %v622 = vsel %vm83, %v616, %v618
    %v623 = vsel %vm83, %v614, %v616
    %v624 = vsel %vm83, %v620, %v614
    %v625 = vmul.f32 %v624, %v92
    %v626 = vmul.f32 %v623, %v96
    %v627 = vmul.f32 %v622, %v100
    %v628 = vmul.f32 %v621, %v104
    %629 = vrot.lane.b32.xlu0 %v609, 16
    %v630 = vpop.permute.xlu0 %629
    %631 = vrot.lane.b32.xlu0 %v610, 16
    %v632 = vpop.permute.xlu0 %631
    %633 = vrot.lane.b32.xlu0 %v611, 16
    %v634 = vpop.permute.xlu0 %633
    %635 = vrot.lane.b32.xlu0 %v612, 16
    %v636 = vpop.permute.xlu0 %635
    %v637 = vsel %vm121, %v634, %v636
    %v638 = vsel %vm121, %v632, %v634
    %v639 = vsel %vm121, %v630, %v632
    %v640 = vsel %vm121, %v636, %v630
    %v641 = vmul.f32 %v640, %v130
    %v642 = vmul.f32 %v639, %v134
    %v643 = vmul.f32 %v638, %v138
    %v644 = vmul.f32 %v637, %v142
    %645 = vrot.lane.b32.xlu0 %v609, 15
    %v646 = vpop.permute.xlu0 %645
    %647 = vrot.lane.b32.xlu0 %v610, 15
    %v648 = vpop.permute.xlu0 %647
    %649 = vrot.lane.b32.xlu0 %v611, 15
    %v650 = vpop.permute.xlu0 %649
    %651 = vrot.lane.b32.xlu0 %v612, 15
    %v652 = vpop.permute.xlu0 %651
    %v653 = vsel %vm159, %v650, %v652
    %v654 = vsel %vm159, %v648, %v650
    %v655 = vsel %vm159, %v646, %v648
    %v656 = vsel %vm159, %v652, %v646
    %v657 = vmul.f32 %v656, %v168
    %v658 = vmul.f32 %v655, %v172
    %v659 = vmul.f32 %v654, %v176
    %v660 = vmul.f32 %v653, %v180
    %661 = vrot.lane.b32.xlu0 %v609, 1
    %v662 = vpop.permute.xlu0 %661
    %663 = vrot.lane.b32.xlu0 %v610, 1
    %v664 = vpop.permute.xlu0 %663
    %665 = vrot.lane.b32.xlu0 %v611, 1
    %v666 = vpop.permute.xlu0 %665
    %667 = vrot.lane.b32.xlu0 %v612, 1
    %v668 = vpop.permute.xlu0 %667
    %v669 = vsel %vm197, %v666, %v668
    %v670 = vsel %vm197, %v664, %v666
    %v671 = vsel %vm197, %v662, %v664
    %v672 = vsel %vm197, %v668, %v662
    %v673 = vmul.f32 %v672, %v206
    %v674 = vmul.f32 %v671, %v210
    %v675 = vmul.f32 %v670, %v214
    %v676 = vmul.f32 %v669, %v218
    %677 = vrot.lane.b32.xlu0 %v609, 127
    %v678 = vpop.permute.xlu0 %677
    %679 = vrot.lane.b32.xlu0 %v610, 127
    %v680 = vpop.permute.xlu0 %679
    %681 = vrot.lane.b32.xlu0 %v611, 127
    %v682 = vpop.permute.xlu0 %681
    %683 = vrot.lane.b32.xlu0 %v612, 127
    %v684 = vpop.permute.xlu0 %683
    %v685 = vsel %vm235, %v682, %v684
    %v686 = vsel %vm235, %v680, %v682
    %v687 = vsel %vm235, %v678, %v680
    %v688 = vsel %vm235, %v684, %v678
    %v689 = vmul.f32 %v687, %v244
    %v690 = vmul.f32 %v686, %v248
    %v691 = vmul.f32 %v685, %v252
    %v692 = vmul.f32 %v688, %v256
    %693 = vrot.lane.b32.xlu0 %v609, 113
    %v694 = vpop.permute.xlu0 %693
    %695 = vrot.lane.b32.xlu0 %v610, 113
    %v696 = vpop.permute.xlu0 %695
    %697 = vrot.lane.b32.xlu0 %v611, 113
    %v698 = vpop.permute.xlu0 %697
    %699 = vrot.lane.b32.xlu0 %v612, 113
    %v700 = vpop.permute.xlu0 %699
    %v701 = vsel %vm273, %v698, %v700
    %v702 = vsel %vm273, %v696, %v698
    %v703 = vsel %vm273, %v694, %v696
    %v704 = vsel %vm273, %v700, %v694
    %v705 = vmul.f32 %v703, %v282
    %v706 = vmul.f32 %v702, %v286
    %v707 = vmul.f32 %v701, %v290
    %v708 = vmul.f32 %v704, %v294
    %709 = vrot.lane.b32.xlu0 %v609, 112
    %v710 = vpop.permute.xlu0 %709
    %711 = vrot.lane.b32.xlu0 %v610, 112
    %v712 = vpop.permute.xlu0 %711
    %713 = vrot.lane.b32.xlu0 %v611, 112
    %v714 = vpop.permute.xlu0 %713
    %715 = vrot.lane.b32.xlu0 %v612, 112
    %v716 = vpop.permute.xlu0 %715
    %v717 = vsel %vm311, %v714, %v716
    %v718 = vsel %vm311, %v712, %v714
    %v719 = vsel %vm311, %v710, %v712
    %v720 = vsel %vm311, %v716, %v710
    %v721 = vmul.f32 %v719, %v320
    %v722 = vmul.f32 %v718, %v324
    %v723 = vmul.f32 %v717, %v328
    %v724 = vmul.f32 %v720, %v332
    %725 = vrot.lane.b32.xlu0 %v609, 111
    %v726 = vpop.permute.xlu0 %725
    %727 = vrot.lane.b32.xlu0 %v610, 111
    %v728 = vpop.permute.xlu0 %727
    %729 = vrot.lane.b32.xlu0 %v611, 111
    %v730 = vpop.permute.xlu0 %729
    %731 = vrot.lane.b32.xlu0 %v612, 111
    %v732 = vpop.permute.xlu0 %731
    %v733 = vsel %vm349, %v730, %v732
    %v734 = vsel %vm349, %v728, %v730
    %v735 = vsel %vm349, %v726, %v728
    %v736 = vsel %vm349, %v732, %v726
    %v737 = vmul.f32 %v735, %v358
    %v738 = vmul.f32 %v734, %v362
    %v739 = vmul.f32 %v733, %v366
    %v740 = vmul.f32 %v736, %v370
    %v745 = vrot.slane %v641, 4
    %v746 = vrot.slane %v642, 4
    %v747 = vrot.slane %v643, 4
    %v748 = vrot.slane %v644, 4
    %v757 = vrot.slane %v673, 4
    %v758 = vrot.slane %v674, 4
    %v759 = vrot.slane %v675, 4
    %v760 = vrot.slane %v676, 4
    %v769 = vrot.slane %v689, 4
    %v770 = vrot.slane %v690, 4
    %v771 = vrot.slane %v691, 4
    %v772 = vrot.slane %v692, 4
    %v781 = vrot.slane %v721, 4
    %v782 = vrot.slane %v722, 4
    %v783 = vrot.slane %v723, 4
    %v784 = vrot.slane %v724, 4
    %v789 = vsel %vm427, %v625, %v745
    %v790 = vsel %vm427, %v626, %v746
    %v791 = vsel %vm427, %v627, %v747
    %v792 = vsel %vm427, %v628, %v748
    %v793 = vsel %vm427, %v657, %v757
    %v794 = vsel %vm427, %v658, %v758
    %v795 = vsel %vm427, %v659, %v759
    %v796 = vsel %vm427, %v660, %v760
    %v797 = vsel %vm427, %v609, %v769
    %v798 = vsel %vm427, %v610, %v770
    %v799 = vsel %vm427, %v611, %v771
    %v800 = vsel %vm427, %v612, %v772
    %v801 = vsel %vm427, %v705, %v781
    %v802 = vsel %vm427, %v706, %v782
    %v803 = vsel %vm427, %v707, %v783
    %v804 = vsel %vm427, %v708, %v784
    %v805 = vld [vmem:[%s4] sm:$0xf]
    %v806 = vld [vmem:[%s5] sm:$0xf]
    %808 = vset.pattern.permute.xlu0 0
    %809 = vperm.xlu0 %808, %v806
    %v810 = vpop.permute.xlu0 %809
    %v813 = vsel %vm451, %v805, 0
    %v816 = vsel %vm427, %v737, 0
    %v819 = vsel %vm427, %v738, 0
    %v822 = vsel %vm427, %v739, 0
    %v825 = vsel %vm427, %v740, 0
    %827 = vmatprep.subr.mxu0 0.0
    %828 = vmatpush1.msra.mxu0 0.0
    %829 = vmatprep.subr.mxu0 0.0
    %830 = vmatpush1.msra.mxu0 0.0
    %831 = vmatprep.subr.mxu0 0.0
    %832 = vmatpush1.msra.mxu0 0.0
    %833 = vmatprep.subr.mxu0 0.0
    %834 = vmatpush1.msra.mxu0 0.0
    %835 = vmatprep.subr.mxu0 0.0
    %836 = vmatpush1.msra.mxu0 0.0
    %837 = vmatprep.subr.mxu0 0.0
    %838 = vmatpush1.msra.mxu0 0.0
    %839 = vmatprep.subr.mxu0 0.0
    %840 = vmatpush1.msra.mxu0 0.0
    %841 = vmatprep.subr.mxu0 0.0
    %842 = vmatpush1.msra.mxu0 0.0
    %843 = vmatprep.subr.mxu0 0.0
    %844 = vmatpush1.msra.mxu0 0.0
    %845 = vmatprep.subr.mxu0 0.0
    %846 = vmatpush1.msra.mxu0 0.0
    %847 = vmatprep.subr.mxu0 0.0
    %848 = vmatpush1.msra.mxu0 0.0
    %849 = vmatprep.subr.mxu0 %v819
    %850 = vmatpush1.msra.mxu0 %v816
    %851 = vmatprep.subr.mxu0 %v802
    %852 = vmatpush1.msra.mxu0 %v801
    %853 = vmatprep.subr.mxu0 %v798
    %854 = vmatpush1.msra.mxu0 %v797
    %855 = vmatprep.subr.mxu0 %v794
    %856 = vmatpush1.msra.mxu0 %v793
    %857 = vmatprep.subr.mxu0 %v790
    %858 = vmatpush1.msra.mxu0 %v789
    %859 = vmatprep.subr.mxu0 0.0
    %860 = vmatpush2.msra.mxu0 0.0
    %861 = vmatprep.subr.mxu0 0.0
    %862 = vmatpush2.msra.mxu0 0.0
    %863 = vmatprep.subr.mxu0 0.0
    %864 = vmatpush2.msra.mxu0 0.0
    %865 = vmatprep.subr.mxu0 0.0
    %866 = vmatpush2.msra.mxu0 0.0
    %867 = vmatprep.subr.mxu0 0.0
    %868 = vmatpush2.msra.mxu0 0.0
    %869 = vmatprep.subr.mxu0 0.0
    %870 = vmatpush2.msra.mxu0 0.0
    %871 = vmatprep.subr.mxu0 0.0
    %872 = vmatpush2.msra.mxu0 0.0
    %873 = vmatprep.subr.mxu0 0.0
    %874 = vmatpush2.msra.mxu0 0.0
    %875 = vmatprep.subr.mxu0 0.0
    %876 = vmatpush2.msra.mxu0 0.0
    %877 = vmatprep.subr.mxu0 0.0
    %878 = vmatpush2.msra.mxu0 0.0
    %879 = vmatprep.subr.mxu0 0.0
    %880 = vmatpush2.msra.mxu0 0.0
    %881 = vmatprep.subr.mxu0 0.0
    %882 = vmatpush2.msra.mxu0 0.0
    %883 = vmatprep.subr.mxu0 0.0
    %884 = vmatpush2.msra.mxu0 0.0
    %885 = vmatprep.subr.mxu0 0.0
    %886 = vmatpush2.msra.mxu0 0.0
    %887 = vmatprep.subr.mxu0 0.0
    %888 = vmatpush2.msra.mxu0 0.0
    %889 = vmatprep.subr.mxu0 0.0
    %890 = vmatpush2.msra.mxu0 0.0
    %891 = vmatprep.mubr.f32.mxu0 0.0
    %892 = vmatmul.mubr.f32.gmra.mxu0 %v813
    %v893 = vpop.f32.mrf.mxu0
    %v894 = vadd.f32 %v810, %v893
    %v895 = vpop.f32.mrf.mxu0
    %v896 = vadd.f32 %v810, %v895
    %897 = vdwg.mxu0
    %898 = vmatprep.subr.mxu0 0.0
    %899 = vmatpush1.msra.mxu0 0.0
    %900 = vmatprep.subr.mxu0 0.0
    %901 = vmatpush1.msra.mxu0 0.0
    %902 = vmatprep.subr.mxu0 0.0
    %903 = vmatpush1.msra.mxu0 0.0
    %904 = vmatprep.subr.mxu0 0.0
    %905 = vmatpush1.msra.mxu0 0.0
    %906 = vmatprep.subr.mxu0 0.0
    %907 = vmatpush1.msra.mxu0 0.0
    %908 = vmatprep.subr.mxu0 0.0
    %909 = vmatpush1.msra.mxu0 0.0
    %910 = vmatprep.subr.mxu0 0.0
    %911 = vmatpush1.msra.mxu0 0.0
    %912 = vmatprep.subr.mxu0 0.0
    %913 = vmatpush1.msra.mxu0 0.0
    %914 = vmatprep.subr.mxu0 0.0
    %915 = vmatpush1.msra.mxu0 0.0
    %916 = vmatprep.subr.mxu0 0.0
    %917 = vmatpush1.msra.mxu0 0.0
    %918 = vmatprep.subr.mxu0 0.0
    %919 = vmatpush1.msra.mxu0 0.0
    %920 = vmatprep.subr.mxu0 %v825
    %921 = vmatpush1.msra.mxu0 %v822
    %922 = vmatprep.subr.mxu0 %v804
    %923 = vmatpush1.msra.mxu0 %v803
    %924 = vmatprep.subr.mxu0 %v800
    %925 = vmatpush1.msra.mxu0 %v799
    %926 = vmatprep.subr.mxu0 %v796
    %927 = vmatpush1.msra.mxu0 %v795
    %928 = vmatprep.subr.mxu0 %v792
    %929 = vmatpush1.msra.mxu0 %v791
    %930 = vmatprep.subr.mxu0 0.0
    %931 = vmatpush2.msra.mxu0 0.0
    %932 = vmatprep.subr.mxu0 0.0
    %933 = vmatpush2.msra.mxu0 0.0
    %934 = vmatprep.subr.mxu0 0.0
    %935 = vmatpush2.msra.mxu0 0.0
    %936 = vmatprep.subr.mxu0 0.0
    %937 = vmatpush2.msra.mxu0 0.0
    %938 = vmatprep.subr.mxu0 0.0
    %939 = vmatpush2.msra.mxu0 0.0
    %940 = vmatprep.subr.mxu0 0.0
    %941 = vmatpush2.msra.mxu0 0.0
    %942 = vmatprep.subr.mxu0 0.0
    %943 = vmatpush2.msra.mxu0 0.0
    %944 = vmatprep.subr.mxu0 0.0
    %945 = vmatpush2.msra.mxu0 0.0
    %946 = vmatprep.subr.mxu0 0.0
    %947 = vmatpush2.msra.mxu0 0.0
    %948 = vmatprep.subr.mxu0 0.0
    %949 = vmatpush2.msra.mxu0 0.0
    %950 = vmatprep.subr.mxu0 0.0
    %951 = vmatpush2.msra.mxu0 0.0
    %952 = vmatprep.subr.mxu0 0.0
    %953 = vmatpush2.msra.mxu0 0.0
    %954 = vmatprep.subr.mxu0 0.0
    %955 = vmatpush2.msra.mxu0 0.0
    %956 = vmatprep.subr.mxu0 0.0
    %957 = vmatpush2.msra.mxu0 0.0
    %958 = vmatprep.subr.mxu0 0.0
    %959 = vmatpush2.msra.mxu0 0.0
    %960 = vmatprep.subr.mxu0 0.0
    %961 = vmatpush2.msra.mxu0 0.0
    %962 = vmatprep.mubr.f32.mxu0 0.0
    %963 = vmatmul.mubr.f32.gmra.mxu0 %v813
    %v964 = vpop.f32.mrf.mxu0
    %v965 = vadd.f32 %v810, %v964
    %v966 = vpop.f32.mrf.mxu0
    %v967 = vadd.f32 %v810, %v966
    %968 = vdwg.mxu0
    %v973 = vcombine.low %v894, %v896
    %v974 = vcombine.low %v965, %v967
    %v977 = vadd.f32 %v50, %v973
    %v978 = vadd.f32 %v51, %v974
    %979 = vst [vmem:[#allocation7] sm:$0xff] %v977
    %980 = vst [vmem:[#allocation7 + $0x8] sm:$0xff] %v978
    // Predicated region
    $region34: #{tpu_custom_call.1} parent=1 // pred_check
      _
    $region35: #{tpu_custom_call.1} parent=1 // pred_check_branch
      %982 = sbr.rel (0) target = $region37
    $region36: #{tpu_custom_call.1} parent=1 // pred_region
      %s984 = ssub.s32 256, 256
      %985 = vsyncadd [#allocation4], %s984
      %s987 = sshll.u32 [#allocation7], 4
      %s988 = int_to_ptr.vmem [resolvable:$true] %s987
      %990 = dma.vmem_to_hbm [thread:$0]  %s988, 256, %s6, [#allocation4]
    $region37: #{tpu_custom_call.1} parent=1 // pred_fallthru
      _
    // Predicated region
    $region38: #{tpu_custom_call.1} parent=1 // pred_check
      _
    $region39: #{tpu_custom_call.1} parent=1 // pred_check_branch
      %992 = sbr.rel (0) target = $region41
    $region40: #{tpu_custom_call.1} parent=1 // pred_region
      %993 = dma.done [#allocation4], 256
    $region41: #{tpu_custom_call.1} parent=1 // pred_fallthru
      _
    %994 = vsyncpa [#allocation3], 1
    %995 = vsyncpa [#allocation6], 1
    %996 = vsyncpa [#allocation4], 1

</llo_original>
